<compile_context>
chip_gen: v7x
topology: tpu7x:2x2x1
jax: 0.10.0
libtpu: 0.0.40
codegen_flags: <defaults>
</compile_context>

<pallas_src>
import functools

import jax
import jax.numpy as jnp
from jax.experimental import pallas as pl
from jax.experimental.pallas import tpu as pltpu


def _round_up(x, m):
    return ((x + m - 1) // m) * m


def cnn2d_kernel(x_ref, w1_ref, b1_ref, w2_ref, o_ref, h_acc, *, tk):
    """One (j, k) grid step.

    x_ref  : (B_pad, K_pad)  bf16, fully VMEM-resident (constant block index)
    w1_ref : (tk, tn)        bf16, streamed W1 tile
    b1_ref : (1, tn)         f32 conv bias tile
    w2_ref : (tn, S_pad)     bf16 fc weight tile (changes only with j)
    o_ref  : (1, B_pad, S_pad) f32 per-j partial fc output
    h_acc  : (B_pad, tn)     f32 scratch accumulator for this HIDDEN tile
    """
    k = pl.program_id(1)
    nk = pl.num_programs(1)

    # h accumulator init for this HIDDEN tile: fold b1 into the init.
    @pl.when(k == 0)
    def _():
        h_acc[...] = jnp.broadcast_to(b1_ref[...], h_acc.shape)

    # Conv-as-matmul: slice the resident x block, (B_pad, tk) @ (tk, tn),
    # f32 accumulation on the MXU.
    start = pl.multiple_of(k * tk, 128)
    x_tile = x_ref[:, pl.ds(start, tk)]
    h_acc[...] += jnp.dot(x_tile, w1_ref[...],
                          preferred_element_type=jnp.float32)

    # At the last K step of this HIDDEN tile, emit this tile's fc partial:
    # partial_j = (h_tile) @ W2_tile.  bf16 MXU path, f32 accumulation.
    @pl.when(k == nk - 1)
    def _():
        o_ref[0] = jnp.dot(h_acc[...].astype(w2_ref.dtype), w2_ref[...],
                           preferred_element_type=jnp.float32)


def pack_cnn2d_params(conv_w, conv_b, fc_w, fc_b, *,
                      tile_k=3072, tile_n=1280,
                      weight_dtype=jnp.bfloat16):
    """Pack/cast/pad the module parameters ONCE (cache the result).

    conv_w: (10*S, 1, L, S), conv_b: (10*S,)
    fc_w:   (S, 10*S),       fc_b:   (S,)
    """
    H, _, L, S = conv_w.shape
    K = L * S

    # Tile sizes: multiples of 128, clamped to the (128-rounded) problem dims.
    tk = min(_round_up(tile_k, 128), _round_up(K, 128))
    tn = min(_round_up(tile_n, 128), _round_up(H, 128))
    K_pad = _round_up(K, tk)
    H_pad = _round_up(H, tn)
    S_pad = _round_up(S, 128)

    # Flatten exactly as PyTorch does for the full-extent conv (row-major over
    # (C=1, L, S), matching how the conv weight (C_out, 1, L, S) flattens).
    w1 = conv_w.reshape(H, K).T.astype(weight_dtype)            # (K, H)
    w1_p = jnp.pad(w1, ((0, K_pad - K), (0, H_pad - H)))
    b1_p = jnp.pad(conv_b.astype(jnp.float32)[None, :],
                   ((0, 0), (0, H_pad - H)))                    # (1, H_pad)

    w2 = fc_w.T.astype(weight_dtype)                            # (H, S)
    w2_p = jnp.pad(w2, ((0, H_pad - H), (0, S_pad - S)))
    b2 = fc_b.astype(jnp.float32)                               # (S,)

    return dict(w1=w1_p, b1=b1_p, w2=w2_p, b2=b2,
                tk=tk, tn=tn, K=K, S=S, H=H,
                K_pad=K_pad, H_pad=H_pad, S_pad=S_pad,
                dtype=weight_dtype)


def cnn2d_forward(x, params, *, vmem_limit_bytes=48 * 1024 * 1024):
    """Forward pass of CNN2D using pre-packed params.

    x: (B, 1, L, S) float32 (NCHW, like PyTorch).  Returns (B, S) float32.
    """
    B = x.shape[0]
    tk, tn = params["tk"], params["tn"]
    K, S = params["K"], params["S"]
    K_pad, H_pad, S_pad = params["K_pad"], params["H_pad"], params["S_pad"]
    dtype = params["dtype"]

    B_pad = _round_up(max(B, 8), 8)
    x_flat = x.reshape(B, -1).astype(dtype)
    x_p = jnp.pad(x_flat, ((0, B_pad - B), (0, K_pad - K)))

    nj = H_pad // tn          # HIDDEN tiles (parallel; split across TCs)
    nk = K_pad // tk          # K tiles (reduction, innermost)
    grid = (nj, nk)

    itemsize = jnp.dtype(dtype).itemsize
    bytes_accessed = (B_pad * K_pad * itemsize          # x (resident, read once)
                      + K_pad * H_pad * itemsize        # W1 stream (dominant)
                      + H_pad * S_pad * itemsize        # W2
                      + H_pad * 4                       # b1
                      + nj * B_pad * S_pad * 4)         # partial outputs
    flops = 2 * B_pad * K_pad * H_pad + 2 * B_pad * H_pad * S_pad
    cost = pl.CostEstimate(flops=flops, transcendentals=0,
                           bytes_accessed=bytes_accessed)

    partials = pl.pallas_call(
        functools.partial(cnn2d_kernel, tk=tk),
        out_shape=jax.ShapeDtypeStruct((nj, B_pad, S_pad), jnp.float32),
        grid_spec=pltpu.PrefetchScalarGridSpec(
            num_scalar_prefetch=0,
            grid=grid,
            in_specs=[
                # x: fully VMEM-resident, constant block index -> DMA'd once.
                pl.BlockSpec((B_pad, K_pad), lambda j, k: (0, 0)),
                # W1: the big streamed operand (default 2-deep buffering).
                pl.BlockSpec((tk, tn), lambda j, k: (k, j)),
                # b1: tiny, per-HIDDEN-tile.
                pl.BlockSpec((1, tn), lambda j, k: (0, j)),
                # W2: per-HIDDEN-tile (re-fetched only when j changes).
                pl.BlockSpec((tn, S_pad), lambda j, k: (j, 0)),
            ],
            # Per-j partial outputs: j axis can be "parallel" (no shared
            # accumulator), so v7x's two TensorCores each stream half of W1.
            out_specs=pl.BlockSpec((1, B_pad, S_pad), lambda j, k: (j, 0, 0)),
            scratch_shapes=[pltpu.VMEM((B_pad, tn), jnp.float32)],
        ),
        compiler_params=pltpu.CompilerParams(
            dimension_semantics=("parallel", "arbitrary"),
            vmem_limit_bytes=vmem_limit_bytes),
        cost_estimate=cost,
    )(x_p, params["w1"], params["b1"], params["w2"])

    # Tiny epilogue: sum the nj partials, slice off padding, add b2.
    out = partials.sum(axis=0)[:B, :S] + params["b2"][None, :]
    return out


def reference_forward(x, conv_w, conv_b, fc_w, fc_b,
                      weight_dtype=jnp.bfloat16):
    """Pure-JAX reference mirroring the kernel's dtype pipeline
    (bf16 operands, f32 accumulation, bf16 h before the fc matmul)."""
    B = x.shape[0]
    H = conv_w.shape[0]
    xf = x.reshape(B, -1).astype(weight_dtype)
    w1 = conv_w.reshape(H, -1).T.astype(weight_dtype)
    w2 = fc_w.T.astype(weight_dtype)
    h = (jnp.dot(xf, w1, preferred_element_type=jnp.float32)
         + conv_b.astype(jnp.float32)[None, :])
    y = (jnp.dot(h.astype(weight_dtype), w2, preferred_element_type=jnp.float32)
         + fc_b.astype(jnp.float32)[None, :])
    return y


if __name__ == "__main__":
    # Scaled-down shapes (the real module uses num_stocks=503, lookback=30).
    NUM_STOCKS = 32
    LOOKBACK = 8
    BATCH = 2
    HIDDEN = 10 * NUM_STOCKS           # conv1 out_channels

    key = jax.random.PRNGKey(0)
    kx, k1, k2, k3, k4 = jax.random.split(key, 5)
    x = jax.random.normal(kx, (BATCH, 1, LOOKBACK, NUM_STOCKS), jnp.float32)
    conv_w = jax.random.normal(
        k1, (HIDDEN, 1, LOOKBACK, NUM_STOCKS), jnp.float32) * 0.02
    conv_b = jax.random.normal(k2, (HIDDEN,), jnp.float32) * 0.02
    fc_w = jax.random.normal(k3, (NUM_STOCKS, HIDDEN), jnp.float32) * 0.02
    fc_b = jax.random.normal(k4, (NUM_STOCKS,), jnp.float32) * 0.02

    # Pack the weights ONCE (at production shapes this reads ~300 MB f32 and
    # writes ~150 MB bf16, so it must be cached rather than re-done per call).
    # Small tiles here so the demo exercises the 2-D streaming grid
    # (K_pad=256/tk=128 -> 2 k-steps, H_pad=384/tn=128 -> 3 parallel j-steps).
    # At production shapes use the defaults (tile_k=3072, tile_n=1280:
    # ~7.9 MB bf16 W1 blocks, ~20 grid steps, nj=4 split across TCs on v7x).
    packed = pack_cnn2d_params(x_conv_w := conv_w, conv_b, fc_w, fc_b,
                               tile_k=128, tile_n=128)

    out = cnn2d_forward(x, packed)
    out = jax.block_until_ready(out)

    ref = reference_forward(x, conv_w, conv_b, fc_w, fc_b)
    assert out.shape == (BATCH, NUM_STOCKS)
    max_err = float(jnp.max(jnp.abs(out - ref)))
    assert jnp.allclose(out, ref, atol=1e-3, rtol=1e-3), f"max_err={max_err}"

    print("KERNEL_OK")
</pallas_src>

<mosaic_0001>
module attributes {stable_mosaic.version = 11 : i64} {
  func.func @cnn2d_kernel(%arg0: i32, %arg1: i32, %arg2: memref<8x256xbf16, #tpu.memory_space<vmem>>, %arg3: memref<128x128xbf16, #tpu.memory_space<vmem>>, %arg4: memref<1x128xf32, #tpu.memory_space<vmem>>, %arg5: memref<128x128xbf16, #tpu.memory_space<vmem>>, %arg6: memref<1x8x128xf32, #tpu.memory_space<vmem>>, %arg7: memref<8x128xf32, #tpu.memory_space<vmem>>) attributes {dimension_semantics = [#tpu.dimension_semantics<parallel>, #tpu.dimension_semantics<arbitrary>], iteration_bounds = array<i64: 3, 2>, scalar_prefetch = 0 : i64, scratch_operands = 1 : i64, tpu.core_type = #tpu.core_type<tc>, window_params = [{pipeline_mode = #tpu.pipeline_mode<synchronous>, transform_indices = @transform_0, window_bounds = array<i64: 8, 256>}, {transform_indices = @transform_1, window_bounds = array<i64: 128, 128>}, {transform_indices = @transform_2, window_bounds = array<i64: 1, 128>}, {transform_indices = @transform_3, window_bounds = array<i64: 128, 128>}, {transform_indices = @transform_4, window_bounds = array<i64: 1, 8, 128>}]} {
    %c0_i32 = arith.constant 0 : i32
    %0 = arith.cmpi eq, %arg1, %c0_i32 : i32
    %1 = arith.extui %0 : i1 to i32
    %c0_i32_0 = arith.constant 0 : i32
    %2 = arith.cmpi ne, %1, %c0_i32_0 : i32
    scf.if %2 {
      %c0_8 = arith.constant 0 : index
      %c0_9 = arith.constant 0 : index
      %15 = vector.load %arg4[%c0_8, %c0_9] : memref<1x128xf32, #tpu.memory_space<vmem>>, vector<1x128xf32>
      %16 = vector.shape_cast %15 : vector<1x128xf32> to vector<1x128xf32>
      %17 = vector.broadcast %16 : vector<1x128xf32> to vector<8x128xf32>
      %c0_10 = arith.constant 0 : index
      %c0_11 = arith.constant 0 : index
      %18 = vector.load %arg7[%c0_10, %c0_11] : memref<8x128xf32, #tpu.memory_space<vmem>>, vector<8x128xf32>
      tpu.vector_store %arg7[%c0_10, %c0_11], %17 {strides = array<i32>} : memref<8x128xf32, #tpu.memory_space<vmem>>, vector<8x128xf32>,
    } else {
    }
    %c128_i32 = arith.constant 128 : i32
    %3 = arith.muli %arg1, %c128_i32 : i32
    %4 = tpu.assume_multiple %3, 128 : i32
    %c0 = arith.constant 0 : index
    %5 = arith.index_cast %4 : i32 to index
    %6 = vector.load %arg2[%c0, %5] : memref<8x256xbf16, #tpu.memory_space<vmem>>, vector<8x128xbf16>
    %c0_1 = arith.constant 0 : index
    %c0_2 = arith.constant 0 : index
    %7 = vector.load %arg7[%c0_1, %c0_2] : memref<8x128xf32, #tpu.memory_space<vmem>>, vector<8x128xf32>
    %c0_3 = arith.constant 0 : index
    %c0_4 = arith.constant 0 : index
    %8 = vector.load %arg3[%c0_3, %c0_4] : memref<128x128xbf16, #tpu.memory_space<vmem>>, vector<128x128xbf16>
    %cst = arith.constant dense<0.000000e+00> : vector<8x128xf32>
    %9 = tpu.matmul %6, %8, %cst {dimension_numbers = #tpu.dot_dimension_numbers<[1], [0], [0], [1], [0, 0, 1, 1], [], []>} : vector<8x128xbf16>, vector<128x128xbf16>, vector<8x128xf32> -> vector<8x128xf32>
    %10 = arith.addf %7, %9 : vector<8x128xf32>
    %c0_5 = arith.constant 0 : index
    %c0_6 = arith.constant 0 : index
    %11 = vector.load %arg7[%c0_5, %c0_6] : memref<8x128xf32, #tpu.memory_space<vmem>>, vector<8x128xf32>
    tpu.vector_store %arg7[%c0_5, %c0_6], %10 {strides = array<i32>} : memref<8x128xf32, #tpu.memory_space<vmem>>, vector<8x128xf32>,
    %c1_i32 = arith.constant 1 : i32
    %12 = arith.cmpi eq, %arg1, %c1_i32 : i32
    %13 = arith.extui %12 : i1 to i32
    %c0_i32_7 = arith.constant 0 : i32
    %14 = arith.cmpi ne, %13, %c0_i32_7 : i32
    scf.if %14 {
      %c0_8 = arith.constant 0 : index
      %c0_9 = arith.constant 0 : index
      %15 = vector.load %arg7[%c0_8, %c0_9] : memref<8x128xf32, #tpu.memory_space<vmem>>, vector<8x128xf32>
      %16 = arith.truncf %15 : vector<8x128xf32> to vector<8x128xbf16>
      %c0_10 = arith.constant 0 : index
      %c0_11 = arith.constant 0 : index
      %17 = vector.load %arg5[%c0_10, %c0_11] : memref<128x128xbf16, #tpu.memory_space<vmem>>, vector<128x128xbf16>
      %cst_12 = arith.constant dense<0.000000e+00> : vector<8x128xf32>
      %18 = tpu.matmul %16, %17, %cst_12 {dimension_numbers = #tpu.dot_dimension_numbers<[1], [0], [0], [1], [0, 0, 1, 1], [], []>} : vector<8x128xbf16>, vector<128x128xbf16>, vector<8x128xf32> -> vector<8x128xf32>
      %c0_13 = arith.constant 0 : index
      %c0_14 = arith.constant 0 : index
      %c0_15 = arith.constant 0 : index
      %19 = vector.load %arg6[%c0_13, %c0_14, %c0_15] : memref<1x8x128xf32, #tpu.memory_space<vmem>>, vector<1x8x128xf32>
      %20 = vector.shape_cast %19 : vector<1x8x128xf32> to vector<8x128xf32>
      %21 = vector.shape_cast %18 : vector<8x128xf32> to vector<1x8x128xf32>
      tpu.vector_store %arg6[%c0_13, %c0_14, %c0_15], %21 {strides = array<i32>} : memref<1x8x128xf32, #tpu.memory_space<vmem>>, vector<1x8x128xf32>,
    } else {
    }
    return
  }
  func.func @transform_0(%arg0: i32, %arg1: i32) -> (i32, i32) {
    %c0_i32 = arith.constant 0 : i32
    %c0_i32_0 = arith.constant 0 : i32
    %c0_i32_1 = arith.constant 0 : i32
    return %c0_i32, %c0_i32_0 : i32, i32
  }
  func.func @transform_1(%arg0: i32, %arg1: i32) -> (i32, i32) {
    %c0_i32 = arith.constant 0 : i32
    return %arg1, %arg0 : i32, i32
  }
  func.func @transform_2(%arg0: i32, %arg1: i32) -> (i32, i32) {
    %c0_i32 = arith.constant 0 : i32
    %c0_i32_0 = arith.constant 0 : i32
    return %c0_i32, %arg0 : i32, i32
  }
  func.func @transform_3(%arg0: i32, %arg1: i32) -> (i32, i32) {
    %c0_i32 = arith.constant 0 : i32
    %c0_i32_0 = arith.constant 0 : i32
    return %arg0, %c0_i32 : i32, i32
  }
  func.func @transform_4(%arg0: i32, %arg1: i32) -> (i32, i32, i32) {
    %c0_i32 = arith.constant 0 : i32
    %c0_i32_0 = arith.constant 0 : i32
    %c0_i32_1 = arith.constant 0 : i32
    return %arg0, %c0_i32, %c0_i32_0 : i32, i32, i32
  }
}

</mosaic_0001>

<llo_original>
// kernel: tpu_custom_call.1
$region0: #{tpu_custom_call.1}
  #allocation0 [shape = 'u32[]', space=smem, size = 0x4, offset = 0x4, fixed_abs, tag = 'smem constant byte address 0x4 - core index']
  #allocation1 [shape = 'u32[144,128]{1,0:T(1,128)}', space=vmem, size = 0x12000, scoped, tag = 'internal scratch']
  #allocation2 [shape = 'f32[8,128]{1,0:T(8,128)}', space=vmem, size = 0x1000, scoped, tag = 'scratch operand']
  %s0 = inlined_call_operand.hbm [shape: bf16[8,256], index: 0, kind: input, shape index: {}]
  %s1 = inlined_call_operand.hbm [shape: bf16[256,384], index: 1, kind: input, shape index: {}]
  %s2 = inlined_call_operand.vmem [shape: f32[1,384], index: 2, kind: input, shape index: {}]
  %s3 = inlined_call_operand.hbm [shape: bf16[384,128], index: 3, kind: input, shape index: {}]
  %s4 = inlined_call_operand.hbm [shape: f32[3,8,128], index: 4, kind: output, shape index: {}]
  %s5 = sld [smem:[#allocation0]]
  $region69: #{tpu_custom_call.1} parent=0
    _
  %s7 = ssub.s32 1, %s5
  %s8 = scalar_select 0, %s7, %s5
  $region1: #{tpu_custom_call.1} parent=0
    #allocation3 [shape = 'u8[4096]{0}', space=vmem, size = 0x1000, scoped, tag = 'input window, operand 0, single buffered']
    #allocation4 [shape = 's32[2]{0}', space=sflag, size = 0x8, scoped, tag = 'scoped memory for tpu_custom_call.1']
    #allocation5 [shape = 's32[2]{0}', space=sflag, size = 0x8, scoped, tag = 'scoped memory for tpu_custom_call.1']
    #allocation6 [shape = 'u8[65536]{0}', space=vmem, size = 0x10000, scoped, tag = 'input window, operand 1']
    #allocation7 [shape = 's32[2]{0}', space=sflag, size = 0x8, scoped, tag = 'scoped memory for tpu_custom_call.1']
    #allocation8 [shape = 'u8[65536]{0}', space=vmem, size = 0x10000, scoped, tag = 'input window, operand 3']
    #allocation9 [shape = 'u8[8192]{0}', space=vmem, size = 0x2000, scoped, tag = 'output window, operand 0']
    %9 = vsyncpa [#allocation4], 0
    %10 = vsyncpa [#allocation7], 0
    %s11 = scalar_lea.sflag [#allocation7], 1
    %12 = vsyncpa %s11, 0
    %13 = vsyncpa [#allocation5], 0
    %s14 = scalar_lea.sflag [#allocation5], 1
    %15 = vsyncpa %s14, 0
    loop: start=0, step=1, limit=8
    $region2: #{tpu_custom_call.1} parent=1 // loop_pre_header
      _
    $region3: #{tpu_custom_call.1} parent=1 // loop_header
      %s17 = sphi 0, %s21
      %p18 = scmp.ge.s32.totalorder %s17, 8
      %s24 = sphi 0, %s36
      %s25 = sphi 0, %s32
      %s26 = sphi 0, %s24
      %s27 = sphi 0, %s25
      %s28 = sphi 0, %s26
      %s29 = sphi 0, %s27
      %s37 = sphi 0, %s37
      %s39 = sphi 0, %s37
      %s40 = sphi 0, %s39
      %s54 = sphi 0, %s40
      %s62 = sphi 0, %s64
      %s65 = sphi 0, %s62
      %s66 = sphi 0, %s65
      %s82 = sphi 0, %s66
      %s88 = sphi 0, %s90
      %s91 = sphi 0, %s88
      %s92 = sphi 0, %s91
      %s108 = sphi 0, %s92
      %s114 = sphi 0, %s116
      %s117 = sphi 0, %s114
      %s118 = sphi 0, %s117
      %s134 = sphi 0, %s118
      %s140 = sphi 0, %s142
      %s143 = sphi 0, %s140
      %s144 = sphi 0, %s143
      %s160 = sphi 0, %s144
    $region4: #{tpu_custom_call.1} parent=1 // loop_header_branch
      %20 = sbr.rel (%p18) target = $region8
    $region5: #{tpu_custom_call.1} parent=1 // loop_body
      %s22 = ssub.s32 %s17, 1
      %s23 = ssub.s32 %s17, 2
      %s30 = sadd.s32 1, %s25
      %p31 = scmp.ge.s32.totalorder %s30, 2
      %s32 = scalar_select %p31, 0, %s30
      %s33 = sadd.s32 1, %s24
      %s34 = scalar_select %p31, %s33, %s24
      %p35 = scmp.ge.s32.totalorder %s34, 3
      %s36 = scalar_select %p35, 0, %s34
      %s38 = sadd.s32 %s37, 1
      %p41 = scmp.eq.s32.totalorder %s17, 5
      %p42 = scmp.ne.s32.totalorder %s37, %s39
      %p43 = scmp.eq.s32.totalorder %s17, 0
      %p44 = por %p42, %p43
      %p45 = scmp.ne.s32.totalorder %s37, %s39
      %p46 = scmp.eq.s32.totalorder %s22, 5
      %p47 = por %p45, %p46
      %p48 = scmp.ne.s32.totalorder %s39, %s40
      %p49 = scmp.eq.s32.totalorder %s22, 0
      %p50 = por %p48, %p49
      %p51 = scmp.ne.s32.totalorder %s39, %s40
      %p52 = scmp.eq.s32.totalorder %s23, 5
      %p53 = por %p51, %p52
      %p55 = scmp.ne.s32.totalorder %s40, %s54
      %p56 = scmp.eq.s32.totalorder %s23, 0
      %p57 = por %p55, %p56
      %s58 = ssub.s32 %s25, %s32
      %s59 = ssub.s32 %s24, %s36
      %s60 = sor.u32 %s58, %s59
      %p61 = scmp.eq.s32.totalorder %s60, 0
      %s63 = sadd.s32 %s62, 1
      %s64 = scalar_select %p61, %s62, %s63
      %p67 = pneg %p61
      %p68 = scmp.eq.s32.totalorder %s17, 5
      %p69 = por %p67, %p68
      %p70 = scmp.ne.s32.totalorder %s62, %s65
      %p71 = scmp.eq.s32.totalorder %s17, 0
      %p72 = por %p70, %p71
      %p73 = scmp.ne.s32.totalorder %s62, %s65
      %p74 = scmp.eq.s32.totalorder %s22, 5
      %p75 = por %p73, %p74
      %p76 = scmp.ne.s32.totalorder %s65, %s66
      %p77 = scmp.eq.s32.totalorder %s22, 0
      %p78 = por %p76, %p77
      %p79 = scmp.ne.s32.totalorder %s65, %s66
      %p80 = scmp.eq.s32.totalorder %s23, 5
      %p81 = por %p79, %p80
      %p83 = scmp.ne.s32.totalorder %s66, %s82
      %p84 = scmp.eq.s32.totalorder %s23, 0
      %p85 = por %p83, %p84
      %s86 = ssub.s32 %s24, %s36
      %p87 = scmp.eq.s32.totalorder %s86, 0
      %s89 = sadd.s32 %s88, 1
      %s90 = scalar_select %p87, %s88, %s89
      %p93 = pneg %p87
      %p94 = scmp.eq.s32.totalorder %s17, 5
      %p95 = por %p93, %p94
      %p96 = scmp.ne.s32.totalorder %s88, %s91
      %p97 = scmp.eq.s32.totalorder %s17, 0
      %p98 = por %p96, %p97
      %p99 = scmp.ne.s32.totalorder %s88, %s91
      %p100 = scmp.eq.s32.totalorder %s22, 5
      %p101 = por %p99, %p100
      %p102 = scmp.ne.s32.totalorder %s91, %s92
      %p103 = scmp.eq.s32.totalorder %s22, 0
      %p104 = por %p102, %p103
      %p105 = scmp.ne.s32.totalorder %s91, %s92
      %p106 = scmp.eq.s32.totalorder %s23, 5
      %p107 = por %p105, %p106
      %p109 = scmp.ne.s32.totalorder %s92, %s108
      %p110 = scmp.eq.s32.totalorder %s23, 0
      %p111 = por %p109, %p110
      %s112 = ssub.s32 %s24, %s36
      %p113 = scmp.eq.s32.totalorder %s112, 0
      %s115 = sadd.s32 %s114, 1
      %s116 = scalar_select %p113, %s114, %s115
      %p119 = pneg %p113
      %p120 = scmp.eq.s32.totalorder %s17, 5
      %p121 = por %p119, %p120
      %p122 = scmp.ne.s32.totalorder %s114, %s117
      %p123 = scmp.eq.s32.totalorder %s17, 0
      %p124 = por %p122, %p123
      %p125 = scmp.ne.s32.totalorder %s114, %s117
      %p126 = scmp.eq.s32.totalorder %s22, 5
      %p127 = por %p125, %p126
      %p128 = scmp.ne.s32.totalorder %s117, %s118
      %p129 = scmp.eq.s32.totalorder %s22, 0
      %p130 = por %p128, %p129
      %p131 = scmp.ne.s32.totalorder %s117, %s118
      %p132 = scmp.eq.s32.totalorder %s23, 5
      %p133 = por %p131, %p132
      %p135 = scmp.ne.s32.totalorder %s118, %s134
      %p136 = scmp.eq.s32.totalorder %s23, 0
      %p137 = por %p135, %p136
      %s138 = ssub.s32 %s24, %s36
      %p139 = scmp.eq.s32.totalorder %s138, 0
      %s141 = sadd.s32 %s140, 1
      %s142 = scalar_select %p139, %s140, %s141
      %p145 = pneg %p139
      %p146 = scmp.eq.s32.totalorder %s17, 5
      %p147 = por %p145, %p146
      %p148 = scmp.ne.s32.totalorder %s140, %s143
      %p149 = scmp.eq.s32.totalorder %s17, 0
      %p150 = por %p148, %p149
      %p151 = scmp.ne.s32.totalorder %s140, %s143
      %p152 = scmp.eq.s32.totalorder %s22, 5
      %p153 = por %p151, %p152
      %p154 = scmp.ne.s32.totalorder %s143, %s144
      %p155 = scmp.eq.s32.totalorder %s22, 0
      %p156 = por %p154, %p155
      %p157 = scmp.ne.s32.totalorder %s143, %s144
      %p158 = scmp.eq.s32.totalorder %s23, 5
      %p159 = por %p157, %p158
      %p161 = scmp.ne.s32.totalorder %s144, %s160
      %p162 = scmp.eq.s32.totalorder %s23, 0
      %p163 = por %p161, %p162
      %p164 = scmp.le.s32.totalorder 1, %s17
      %p165 = scmp.lt.s32.totalorder %s17, 7
      %p166 = pnand %p164, %p165
      %p167 = pneg %p166
      // Predicated region
      $region9: #{tpu_custom_call.1} parent=5 // pred_check
        _
      $region10: #{tpu_custom_call.1} parent=5 // pred_check_branch
        %169 = sbr.rel (%p166) target = $region12
      $region11: #{tpu_custom_call.1} parent=5 // pred_region
        %s170 = ssub.s32 %s17, 1
        // Predicated region
        $region13: #{tpu_custom_call.1} parent=11 // pred_check
          %p171 = pneg %p50
        $region14: #{tpu_custom_call.1} parent=11 // pred_check_branch
          %173 = sbr.rel (%p171) target = $region16
        $region15: #{tpu_custom_call.1} parent=11 // pred_region
          %s175 = ssub.s32 128, 128
          %176 = vsyncadd [#allocation4], %s175
          %s178 = sshll.u32 [#allocation3], 4
          %s179 = int_to_ptr.vmem [resolvable:$true] %s178
          %181 = dma.hbm_to_vmem [thread:$0]  %s0, 128, %s179, [#allocation4]
        $region16: #{tpu_custom_call.1} parent=11 // pred_fallthru
          _
      $region12: #{tpu_custom_call.1} parent=5 // pred_fallthru
        _
      %p182 = scmp.lt.s32.totalorder %s17, 6
      // Predicated region
      $region17: #{tpu_custom_call.1} parent=5 // pred_check
        %p183 = pneg %p182
      $region18: #{tpu_custom_call.1} parent=5 // pred_check_branch
        %185 = sbr.rel (%p183) target = $region20
      $region19: #{tpu_custom_call.1} parent=5 // pred_region
        // Predicated region
        $region21: #{tpu_custom_call.1} parent=19 // pred_check
          %p186 = pneg %p72
        $region22: #{tpu_custom_call.1} parent=19 // pred_check_branch
          %188 = sbr.rel (%p186) target = $region24
        $region23: #{tpu_custom_call.1} parent=19 // pred_region
          %s189 = sand.u32 %s17, 1
          %s190 = scalar_lea.sflag [#allocation7], %s189
          %s191 = sand.u32 %s62, 1
          %s192 = smul.addr %s191, 64
          %s193 = scalar_lea.vmem [#allocation6], %s192
          %s194 = smul.u32 16, %s25
          %s196 = ssub.s32 1024, 1024
          %197 = vsyncadd %s190, %s196
          %s198 = smul.addr %s194, 3
          %s199 = sadd.s32 %s24, %s198
          %s200 = smul.addr %s199, 64
          %s201 = scalar_lea.hbm %s1, %s200
          %s202 = sshll.u32 %s193, 4
          %s203 = int_to_ptr.vmem [resolvable:$true] %s202
          %208 = dma.hbm_to_vmem [thread:$0]  %s201, 1024, %s203, %s190, 192, 64, 4
        $region24: #{tpu_custom_call.1} parent=19 // pred_fallthru
          _
        // Predicated region
        $region25: #{tpu_custom_call.1} parent=19 // pred_check
          %p209 = pneg %p98
        $region26: #{tpu_custom_call.1} parent=19 // pred_check_branch
          %211 = sbr.rel (%p209) target = $region28
        $region27: #{tpu_custom_call.1} parent=19 // pred_region
          %p212 = scmp.lt.s32.totalorder %s24, 2
          %s213 = scalar_select %p212, %s24, 2
          %s214 = scalar_lea.vmem %s2, %s213
        $region28: #{tpu_custom_call.1} parent=19 // pred_fallthru
          _
        // Predicated region
        $region29: #{tpu_custom_call.1} parent=19 // pred_check
          %p215 = pneg %p124
        $region30: #{tpu_custom_call.1} parent=19 // pred_check_branch
          %217 = sbr.rel (%p215) target = $region32
        $region31: #{tpu_custom_call.1} parent=19 // pred_region
          %s218 = sand.u32 %s17, 1
          %s219 = scalar_lea.sflag [#allocation7], %s218
          %s220 = sand.u32 %s114, 1
          %s221 = smul.addr %s220, 64
          %s222 = scalar_lea.vmem [#allocation8], %s221
          %s223 = smul.u32 16, %s24
          %s225 = ssub.s32 1024, 1024
          %226 = vsyncadd %s219, %s225
          %s227 = smul.addr %s223, 64
          %s228 = scalar_lea.hbm %s3, %s227
          %s229 = sshll.u32 %s222, 4
          %s230 = int_to_ptr.vmem [resolvable:$true] %s229
          %235 = dma.hbm_to_vmem [thread:$0]  %s228, 1024, %s230, %s219, 64, 64, 4
        $region32: #{tpu_custom_call.1} parent=19 // pred_fallthru
          _
      $region20: #{tpu_custom_call.1} parent=5 // pred_fallthru
        _
      %p236 = scmp.le.s32.totalorder 1, %s17
      %p237 = scmp.lt.s32.totalorder %s17, 7
      %p238 = pnand %p236, %p237
      %p239 = pneg %p238
      // Predicated region
      $region33: #{tpu_custom_call.1} parent=5 // pred_check
        _
      $region34: #{tpu_custom_call.1} parent=5 // pred_check_branch
        %241 = sbr.rel (%p238) target = $region36
      $region35: #{tpu_custom_call.1} parent=5 // pred_region
        %s242 = ssub.s32 %s17, 1
        // Predicated region
        $region37: #{tpu_custom_call.1} parent=35 // pred_check
          %p243 = pneg %p50
        $region38: #{tpu_custom_call.1} parent=35 // pred_check_branch
          %245 = sbr.rel (%p243) target = $region40
        $region39: #{tpu_custom_call.1} parent=35 // pred_region
          %246 = dma.done [#allocation4], 128
        $region40: #{tpu_custom_call.1} parent=35 // pred_fallthru
          _
        %s247 = sand.u32 %s22, 1
        %s248 = scalar_lea.sflag [#allocation7], %s247
        %s249 = sand.u32 %s65, 1
        %s250 = smul.addr %s249, 64
        %s251 = scalar_lea.vmem [#allocation6], %s250
        // Predicated region
        $region41: #{tpu_custom_call.1} parent=35 // pred_check
          %p252 = pneg %p78
        $region42: #{tpu_custom_call.1} parent=35 // pred_check_branch
          %254 = sbr.rel (%p252) target = $region44
        $region43: #{tpu_custom_call.1} parent=35 // pred_region
          %255 = dma.done %s248, 1024
        $region44: #{tpu_custom_call.1} parent=35 // pred_fallthru
          _
        %s256 = sand.u32 %s22, 1
        %s257 = scalar_lea.sflag [#allocation7], %s256
        %s258 = sand.u32 %s117, 1
        %s259 = smul.addr %s258, 64
        %s260 = scalar_lea.vmem [#allocation8], %s259
        // Predicated region
        $region45: #{tpu_custom_call.1} parent=35 // pred_check
          %p261 = pneg %p130
        $region46: #{tpu_custom_call.1} parent=35 // pred_check_branch
          %263 = sbr.rel (%p261) target = $region48
        $region47: #{tpu_custom_call.1} parent=35 // pred_region
          %264 = dma.done %s257, 1024
        $region48: #{tpu_custom_call.1} parent=35 // pred_fallthru
          _
        %p265 = pneg %p50
        %p266 = pneg %p47
        %s267 = sand.u32 %s22, 1
        %s268 = scalar_lea.sflag [#allocation7], %s267
        %s269 = sand.u32 %s65, 1
        %s270 = smul.addr %s269, 64
        %s271 = scalar_lea.vmem [#allocation6], %s270
        %p272 = pneg %p78
        %p273 = pneg %p75
        %p274 = scmp.lt.s32.totalorder %s26, 2
        %s275 = scalar_select %p274, %s26, 2
        %s276 = scalar_lea.vmem %s2, %s275
        %p277 = pneg %p104
        %p278 = pneg %p101
        %s279 = sand.u32 %s22, 1
        %s280 = scalar_lea.sflag [#allocation7], %s279
        %s281 = sand.u32 %s117, 1
        %s282 = smul.addr %s281, 64
        %s283 = scalar_lea.vmem [#allocation8], %s282
        %p284 = pneg %p130
        %p285 = pneg %p127
        %p286 = pneg %p156
        %p287 = pneg %p153
        %s288 = sand.u32 %s143, 1
        %s289 = scalar_lea.sflag [#allocation5], %s288
        %s290 = sand.u32 %s143, 1
        %s291 = smul.addr %s290, 8
        %s292 = scalar_lea.vmem [#allocation9], %s291
        %s293 = smul.u32 16, %s27
        %p294 = scmp.lt.s32.totalorder %s26, 2
        %s295 = scalar_select %p294, %s26, 2
        %s296 = scalar_lea.vmem %s2, %s295
        %s297 = smul.u32 16, %s26
        %p299 = scmp.eq.s32.totalorder %s27, 0
        // Predicated region
        $region49: #{tpu_custom_call.1} parent=35 // pred_check
          %p300 = pneg %p299
        $region50: #{tpu_custom_call.1} parent=35 // pred_check_branch
          %302 = sbr.rel (%p300) target = $region52
        $region51: #{tpu_custom_call.1} parent=35 // pred_region
          %v303 = vld [vmem:[%s296] sm:$0x1]
          %v305 = vlaneseq
          %v306 = vshrl.u32 %v305, 7
          %v307 = vsub.s32 0, %v306
          %v308 = vrot.slane %v303, %v307
          %310 = vst [vmem:[#allocation2] sm:$0xff] %v308
        $region52: #{tpu_custom_call.1} parent=35 // pred_fallthru
          _
        %s311 = smul.u32 %s27, 128
        %s312 = sshra.s32 %s311, 7
        %s313 = sand.u32 %s311, 127
        %s314 = smul.addr %s312, 4
        %s315 = scalar_lea.vmem [#allocation3], %s314
        %v316 = vld [vmem:[%s315] sm:$0xf]
        %v317 = vld [vmem:[#allocation2] sm:$0xff]
        %v318 = vld [vmem:[%s251] sm:$0xf]
        %v319 = vld [vmem:[%s251 + $0x4] sm:$0xf]
        %v320 = vld [vmem:[%s251 + $0x8] sm:$0xf]
        %v321 = vld [vmem:[%s251 + $0xc] sm:$0xf]
        %v322 = vld [vmem:[%s251 + $0x10] sm:$0xf]
        %v323 = vld [vmem:[%s251 + $0x14] sm:$0xf]
        %v324 = vld [vmem:[%s251 + $0x18] sm:$0xf]
        %v325 = vld [vmem:[%s251 + $0x1c] sm:$0xf]
        %v326 = vld [vmem:[%s251 + $0x20] sm:$0xf]
        %v327 = vld [vmem:[%s251 + $0x24] sm:$0xf]
        %v328 = vld [vmem:[%s251 + $0x28] sm:$0xf]
        %v329 = vld [vmem:[%s251 + $0x2c] sm:$0xf]
        %v330 = vld [vmem:[%s251 + $0x30] sm:$0xf]
        %v331 = vld [vmem:[%s251 + $0x34] sm:$0xf]
        %v332 = vld [vmem:[%s251 + $0x38] sm:$0xf]
        %v333 = vld [vmem:[%s251 + $0x3c] sm:$0xf]
        %v350 = vunpack.c.l.b16 %v318
        %v351 = vunpack.c.l.b16 %v319
        %v352 = vunpack.c.l.b16 %v320
        %v353 = vunpack.c.l.b16 %v321
        %v354 = vunpack.c.l.b16 %v322
        %v355 = vunpack.c.l.b16 %v323
        %v356 = vunpack.c.l.b16 %v324
        %v357 = vunpack.c.l.b16 %v325
        %v358 = vunpack.c.l.b16 %v326
        %v359 = vunpack.c.l.b16 %v327
        %v360 = vunpack.c.l.b16 %v328
        %v361 = vunpack.c.l.b16 %v329
        %v362 = vunpack.c.l.b16 %v330
        %v363 = vunpack.c.l.b16 %v331
        %v364 = vunpack.c.l.b16 %v332
        %v365 = vunpack.c.l.b16 %v333
        %v366 = vpack.c.b16 %v351, %v350
        %v367 = vpack.c.b16 %v353, %v352
        %v368 = vpack.c.b16 %v355, %v354
        %v369 = vpack.c.b16 %v357, %v356
        %v370 = vpack.c.b16 %v359, %v358
        %v371 = vpack.c.b16 %v361, %v360
        %v372 = vpack.c.b16 %v363, %v362
        %v373 = vpack.c.b16 %v365, %v364
        %382 = vmatprep.subr.bf16.mxu0 0
        %383 = vmatpush1.bf16.msra.mxu0 %v366
        %384 = vmatprep.subr.bf16.mxu0 0
        %385 = vmatpush1.bf16.msra.mxu0 %v367
        %386 = vmatprep.subr.bf16.mxu0 0
        %387 = vmatpush1.bf16.msra.mxu0 %v368
        %388 = vmatprep.subr.bf16.mxu0 0
        %389 = vmatpush1.bf16.msra.mxu0 %v369
        %390 = vmatprep.subr.bf16.mxu0 0
        %391 = vmatpush1.bf16.msra.mxu0 %v370
        %392 = vmatprep.subr.bf16.mxu0 0
        %393 = vmatpush1.bf16.msra.mxu0 %v371
        %394 = vmatprep.subr.bf16.mxu0 0
        %395 = vmatpush1.bf16.msra.mxu0 %v372
        %396 = vmatprep.subr.bf16.mxu0 0
        %397 = vmatpush1.bf16.msra.mxu0 %v373
        %398 = vmatprep.subr.bf16.mxu0 0
        %399 = vmatpush1.bf16.msra.mxu0 0
        %400 = vmatprep.subr.bf16.mxu0 0
        %401 = vmatpush1.bf16.msra.mxu0 0
        %402 = vmatprep.subr.bf16.mxu0 0
        %403 = vmatpush1.bf16.msra.mxu0 0
        %404 = vmatprep.subr.bf16.mxu0 0
        %405 = vmatpush1.bf16.msra.mxu0 0
        %406 = vmatprep.subr.bf16.mxu0 0
        %407 = vmatpush1.bf16.msra.mxu0 0
        %408 = vmatprep.subr.bf16.mxu0 0
        %409 = vmatpush1.bf16.msra.mxu0 0
        %410 = vmatprep.subr.bf16.mxu0 0
        %411 = vmatpush1.bf16.msra.mxu0 0
        %412 = vmatprep.subr.bf16.mxu0 0
        %413 = vmatpush1.bf16.msra.mxu0 0
        %414 = vmatprep.mubr.bf16.mxu0 0
        %415 = vmatmul.mubr.bf16.gmra.mrb[0].mxu0 %v316
        %v416 = vpop.f32.mrb[0].mxu0
        %v417 = vadd.f32 0.0, %v416
        %v418 = vpop.f32.mrb[0].mxu0
        %v419 = vpop.f32.mrb[0].mxu0
        %v420 = vpop.f32.mrb[0].mxu0
        %421 = vdwg.mxu0
        %v422 = vadd.f32 %v317, %v417
        %423 = vst [vmem:[#allocation2] sm:$0xff] %v422
        %p424 = scmp.eq.s32.totalorder %s27, 1
        // Predicated region
        $region53: #{tpu_custom_call.1} parent=35 // pred_check
          %p425 = pneg %p424
        $region54: #{tpu_custom_call.1} parent=35 // pred_check_branch
          %427 = sbr.rel (%p425) target = $region56
        $region55: #{tpu_custom_call.1} parent=35 // pred_region
          %v428 = vld [vmem:[#allocation2] sm:$0xff]
          %v429 = vpack.c.bf16 %v428, %v428
          %v430 = vld [vmem:[%s260] sm:$0xf]
          %v431 = vld [vmem:[%s260 + $0x4] sm:$0xf]
          %v432 = vld [vmem:[%s260 + $0x8] sm:$0xf]
          %v433 = vld [vmem:[%s260 + $0xc] sm:$0xf]
          %v434 = vld [vmem:[%s260 + $0x10] sm:$0xf]
          %v435 = vld [vmem:[%s260 + $0x14] sm:$0xf]
          %v436 = vld [vmem:[%s260 + $0x18] sm:$0xf]
          %v437 = vld [vmem:[%s260 + $0x1c] sm:$0xf]
          %v438 = vld [vmem:[%s260 + $0x20] sm:$0xf]
          %v439 = vld [vmem:[%s260 + $0x24] sm:$0xf]
          %v440 = vld [vmem:[%s260 + $0x28] sm:$0xf]
          %v441 = vld [vmem:[%s260 + $0x2c] sm:$0xf]
          %v442 = vld [vmem:[%s260 + $0x30] sm:$0xf]
          %v443 = vld [vmem:[%s260 + $0x34] sm:$0xf]
          %v444 = vld [vmem:[%s260 + $0x38] sm:$0xf]
          %v445 = vld [vmem:[%s260 + $0x3c] sm:$0xf]
          %v462 = vunpack.c.l.b16 %v430
          %v463 = vunpack.c.l.b16 %v431
          %v464 = vunpack.c.l.b16 %v432
          %v465 = vunpack.c.l.b16 %v433
          %v466 = vunpack.c.l.b16 %v434
          %v467 = vunpack.c.l.b16 %v435
          %v468 = vunpack.c.l.b16 %v436
          %v469 = vunpack.c.l.b16 %v437
          %v470 = vunpack.c.l.b16 %v438
          %v471 = vunpack.c.l.b16 %v439
          %v472 = vunpack.c.l.b16 %v440
          %v473 = vunpack.c.l.b16 %v441
          %v474 = vunpack.c.l.b16 %v442
          %v475 = vunpack.c.l.b16 %v443
          %v476 = vunpack.c.l.b16 %v444
          %v477 = vunpack.c.l.b16 %v445
          %v478 = vpack.c.b16 %v463, %v462
          %v479 = vpack.c.b16 %v465, %v464
          %v480 = vpack.c.b16 %v467, %v466
          %v481 = vpack.c.b16 %v469, %v468
          %v482 = vpack.c.b16 %v471, %v470
          %v483 = vpack.c.b16 %v473, %v472
          %v484 = vpack.c.b16 %v475, %v474
          %v485 = vpack.c.b16 %v477, %v476
          %494 = vmatprep.subr.bf16.mxu0 0
          %495 = vmatpush1.bf16.msra.mxu0 %v478
          %496 = vmatprep.subr.bf16.mxu0 0
          %497 = vmatpush1.bf16.msra.mxu0 %v479
          %498 = vmatprep.subr.bf16.mxu0 0
          %499 = vmatpush1.bf16.msra.mxu0 %v480
          %500 = vmatprep.subr.bf16.mxu0 0
          %501 = vmatpush1.bf16.msra.mxu0 %v481
          %502 = vmatprep.subr.bf16.mxu0 0
          %503 = vmatpush1.bf16.msra.mxu0 %v482
          %504 = vmatprep.subr.bf16.mxu0 0
          %505 = vmatpush1.bf16.msra.mxu0 %v483
          %506 = vmatprep.subr.bf16.mxu0 0
          %507 = vmatpush1.bf16.msra.mxu0 %v484
          %508 = vmatprep.subr.bf16.mxu0 0
          %509 = vmatpush1.bf16.msra.mxu0 %v485
          %510 = vmatprep.subr.bf16.mxu0 0
          %511 = vmatpush1.bf16.msra.mxu0 0
          %512 = vmatprep.subr.bf16.mxu0 0
          %513 = vmatpush1.bf16.msra.mxu0 0
          %514 = vmatprep.subr.bf16.mxu0 0
          %515 = vmatpush1.bf16.msra.mxu0 0
          %516 = vmatprep.subr.bf16.mxu0 0
          %517 = vmatpush1.bf16.msra.mxu0 0
          %518 = vmatprep.subr.bf16.mxu0 0
          %519 = vmatpush1.bf16.msra.mxu0 0
          %520 = vmatprep.subr.bf16.mxu0 0
          %521 = vmatpush1.bf16.msra.mxu0 0
          %522 = vmatprep.subr.bf16.mxu0 0
          %523 = vmatpush1.bf16.msra.mxu0 0
          %524 = vmatprep.subr.bf16.mxu0 0
          %525 = vmatpush1.bf16.msra.mxu0 0
          %526 = vmatprep.mubr.bf16.mxu0 0
          %527 = vmatmul.mubr.bf16.gmra.mrb[0].mxu0 %v429
          %v528 = vpop.f32.mrb[0].mxu0
          %v529 = vadd.f32 0.0, %v528
          %v530 = vpop.f32.mrb[0].mxu0
          %v531 = vpop.f32.mrb[0].mxu0
          %v532 = vpop.f32.mrb[0].mxu0
          %533 = vdwg.mxu0
          %534 = vst [vmem:[%s292] sm:$0xff] %v529
        $region56: #{tpu_custom_call.1} parent=35 // pred_fallthru
          _
        %s535 = sand.u32 %s143, 1
        %s536 = scalar_lea.sflag [#allocation5], %s535
        %s537 = sand.u32 %s143, 1
        %s538 = smul.addr %s537, 8
        %s539 = scalar_lea.vmem [#allocation9], %s538
        // Predicated region
        $region57: #{tpu_custom_call.1} parent=35 // pred_check
          %p540 = pneg %p153
        $region58: #{tpu_custom_call.1} parent=35 // pred_check_branch
          %542 = sbr.rel (%p540) target = $region60
        $region59: #{tpu_custom_call.1} parent=35 // pred_region
          %s544 = ssub.s32 128, 128
          %545 = vsyncadd %s536, %s544
          %s546 = smul.addr %s26, 128
          %s547 = scalar_lea.hbm %s4, %s546
          %s549 = sshll.u32 %s539, 4
          %s550 = int_to_ptr.vmem [resolvable:$true] %s549
          %552 = dma.vmem_to_hbm [thread:$0]  %s550, 128, %s547, %s536
        $region60: #{tpu_custom_call.1} parent=35 // pred_fallthru
          _
      $region36: #{tpu_custom_call.1} parent=5 // pred_fallthru
        _
      %p553 = scmp.le.s32.totalorder 2, %s17
      // Predicated region
      $region61: #{tpu_custom_call.1} parent=5 // pred_check
        %p554 = pneg %p553
      $region62: #{tpu_custom_call.1} parent=5 // pred_check_branch
        %556 = sbr.rel (%p554) target = $region64
      $region63: #{tpu_custom_call.1} parent=5 // pred_region
        %s557 = ssub.s32 %s17, 2
        // Predicated region
        $region65: #{tpu_custom_call.1} parent=63 // pred_check
          %p558 = pneg %p159
        $region66: #{tpu_custom_call.1} parent=63 // pred_check_branch
          %560 = sbr.rel (%p558) target = $region68
        $region67: #{tpu_custom_call.1} parent=63 // pred_region
          %s561 = sand.u32 %s144, 1
          %s562 = scalar_lea.sflag [#allocation5], %s561
          %s563 = sand.u32 %s144, 1
          %s564 = smul.addr %s563, 8
          %s565 = scalar_lea.vmem [#allocation9], %s564
          %566 = dma.done %s562, 128
        $region68: #{tpu_custom_call.1} parent=63 // pred_fallthru
          _
      $region64: #{tpu_custom_call.1} parent=5 // pred_fallthru
        _
    $region6: #{tpu_custom_call.1} parent=1 // loop_footer
      %s21 = sadd.s32 1, %s17
    $region7: #{tpu_custom_call.1} parent=1 // loop_footer_branch
      %16 = sbr.rel target = $region3
    $region8: #{tpu_custom_call.1} parent=1 // loop_exit
      _
    %567 = vsyncpa [#allocation4], 1
    %s568 = scalar_lea.sflag [#allocation4], 1
    %569 = vsyncpa %s568, 1
    %570 = vsyncpa [#allocation7], 1
    %s571 = scalar_lea.sflag [#allocation7], 1
    %572 = vsyncpa %s571, 1
    %573 = vsyncpa [#allocation5], 1
    %s574 = scalar_lea.sflag [#allocation5], 1
    %575 = vsyncpa %s574, 1

</llo_original>
